<compile_context>
chip_gen: v6e
topology: v6e:2x2x1
jax: 0.10.0
libtpu: 0.0.40
codegen_flags: <defaults>
</compile_context>

<pallas_src>
import functools

import jax
import jax.numpy as jnp
from jax.experimental import pallas as pl
from jax.experimental.pallas import tpu as pltpu

EPS = 1e-5


def _bn_relu_store(h, gb_ref, o_ref):
    """BatchNorm1d (training semantics: batch mean, biased var) + ReLU."""
    mean = jnp.mean(h, axis=0, keepdims=True)
    centered = h - mean
    var = jnp.mean(centered * centered, axis=0, keepdims=True)
    inv_std = jax.lax.rsqrt(var + EPS)
    scale = inv_std * gb_ref[0:1, :]        # fold inv_std into gamma (1, tn)
    beta = gb_ref[1:2, :]
    o_ref[...] = jnp.maximum(centered * scale + beta, 0.0).astype(o_ref.dtype)


def basic_block_kernel_single(x_ref, w_ref, gb_ref, o_ref):
    # Whole D_in resident: single matmul, no accumulator scratch, no phases.
    h = jnp.dot(x_ref[...], w_ref[...], preferred_element_type=jnp.float32)
    _bn_relu_store(h, gb_ref, o_ref)


def basic_block_kernel_multi(x_ref, w_ref, gb_ref, o_ref, acc_ref):
    k = pl.program_id(1)

    @pl.when(k == 0)
    def _():
        acc_ref[...] = jnp.zeros_like(acc_ref)

    acc_ref[...] += jnp.dot(
        x_ref[...], w_ref[...], preferred_element_type=jnp.float32
    )

    @pl.when(k == pl.num_programs(1) - 1)
    def _():
        _bn_relu_store(acc_ref[...], gb_ref, o_ref)


def _round_up(x, m):
    return ((x + m - 1) // m) * m


def _pad_axis(a, target, axis):
    pad = target - a.shape[axis]
    if pad == 0:
        return a
    cfg = [(0, 0)] * a.ndim
    cfg[axis] = (0, pad)
    return jnp.pad(a, cfg)


def _pick_tile(dim_p):
    for c in (512, 256, 128):
        if dim_p % c == 0:
            return c
    return dim_p  # dim_p is already a multiple of 128


def _vmem_capacity_bytes():
    try:
        return int(pltpu.get_tpu_info().vmem_capacity_bytes)
    except Exception:  # pragma: no cover - older jax / interpret fallback
        return 128 << 20


def _vmem_bytes(n, tn, tk, in_bytes, out_bytes, k_steps, w_bufs):
    acc = 0 if k_steps == 1 else 4 * n * tn      # f32 accumulator scratch
    x_buf = 2 * n * tk * in_bytes                # double-buffered x tile
    w_buf = w_bufs * tk * tn * in_bytes          # (multi-)buffered w tile
    o_buf = 2 * n * tn * out_bytes               # double-buffered out tile
    gb_buf = 2 * 8 * tn * 4                      # padded (2, tn) params
    return acc + x_buf + w_buf + o_buf + gb_buf


@functools.partial(jax.jit, static_argnames=("compute_dtype",))
def basic_block(x, w, b, gamma, beta, *, compute_dtype=jnp.float32):
    """Forward of BasicBlock: ReLU(BatchNorm1d(Linear(x))), training-mode BN.

    x: (N, D_in) f32; w: (D_in, D_out); b, gamma, beta: (D_out,).
    `b` is accepted for API fidelity but is mathematically irrelevant before
    training-mode BatchNorm, so it is dropped (exact).
    """
    del b  # exact no-op under training-mode (batch-statistics) BatchNorm
    n, d_in = x.shape
    d_out = w.shape[1]

    # Zero-pad feature axes to lane-dense multiples of 128 (exact).
    d_in_p = _round_up(d_in, 128)
    d_out_p = _round_up(d_out, 128)
    x_p = _pad_axis(x, d_in_p, 1).astype(compute_dtype)
    w_p = _pad_axis(_pad_axis(w, d_in_p, 0), d_out_p, 1).astype(compute_dtype)
    gb = jnp.stack(
        [_pad_axis(gamma, d_out_p, 0), _pad_axis(beta, d_out_p, 0)], axis=0
    ).astype(jnp.float32)                        # (2, D_out_p)

    in_bytes = jnp.dtype(compute_dtype).itemsize
    out_bytes = jnp.dtype(x.dtype).itemsize

    # Generation-aware VMEM budgeting (128 MiB on v5e/v6e, 64 MiB on v7x).
    vmem_cap = _vmem_capacity_bytes()
    vmem_limit = int(vmem_cap * 0.85)
    budget = int(vmem_cap * 0.70)

    # Feature ("parallel") tile: lane-dense; ensure >=2 j tiles when possible
    # so both v7x TensorCores get work.
    tn = _pick_tile(d_out_p)
    if d_out_p // tn < 2 and d_out_p > 128:
        tn = max(128, tn // 2)

    # Reduction tile: keep x fully resident (tk == D_in_p) whenever it fits,
    # so x is streamed from HBM exactly once instead of once per j tile.
    tk = d_in_p
    single_pass = (
        n * d_in_p * in_bytes <= (16 << 20)
        and _vmem_bytes(n, tn, tk, in_bytes, out_bytes, 1, 2) <= budget
    )
    if not single_pass:
        tk = _pick_tile(d_in_p)
        # Shrink tk first (keeps j-tile count == x re-read count small);
        # only then shrink tn.
        while _vmem_bytes(n, tn, tk, in_bytes, out_bytes, 2, 2) > budget and (
            tk > 128 or tn > 128
        ):
            if tk > 128:
                tk //= 2
            else:
                tn //= 2
        if _vmem_bytes(n, tn, tk, in_bytes, out_bytes, 2, 2) > budget:
            # TODO(synk): add a batch-tiled two-pass-BN path for very large N.
            raise ValueError(
                f"BasicBlock Pallas kernel: batch {n} too large for the VMEM "
                f"budget ({budget >> 20} MiB) even at minimal 128x128 tiles."
            )

    k_steps = d_in_p // tk
    grid = (d_out_p // tn, k_steps)

    # Deeper weight prefetch on long reduction loops, if VMEM allows.
    w_bufs = 2
    if k_steps >= 4 and _vmem_bytes(
        n, tn, tk, in_bytes, out_bytes, k_steps, 3
    ) <= budget:
        w_bufs = 3
    if w_bufs == 3:
        w_spec = pl.BlockSpec(
            (tk, tn), lambda j, k: (k, j), pipeline_mode=pl.Buffered(3)
        )
    else:
        w_spec = pl.BlockSpec((tk, tn), lambda j, k: (k, j))

    if k_steps == 1:
        kernel = basic_block_kernel_single
        scratch = []
    else:
        kernel = basic_block_kernel_multi
        scratch = [pltpu.VMEM((n, tn), jnp.float32)]

    out_p = pl.pallas_call(
        kernel,
        out_shape=jax.ShapeDtypeStruct((n, d_out_p), x.dtype),
        grid_spec=pltpu.PrefetchScalarGridSpec(
            num_scalar_prefetch=0,
            grid=grid,
            in_specs=[
                pl.BlockSpec((n, tk), lambda j, k: (0, k)),     # x
                w_spec,                                          # w
                pl.BlockSpec((2, tn), lambda j, k: (0, j)),      # gamma/beta
            ],
            out_specs=pl.BlockSpec((n, tn), lambda j, k: (0, j)),
            scratch_shapes=scratch,
        ),
        compiler_params=pltpu.CompilerParams(
            dimension_semantics=("parallel", "arbitrary"),
            vmem_limit_bytes=vmem_limit,
        ),
    )(x_p, w_p, gb)

    return out_p[:, :d_out]


def reference(x, w, b, gamma, beta):
    h = x @ w + b
    mean = h.mean(axis=0, keepdims=True)
    var = ((h - mean) ** 2).mean(axis=0, keepdims=True)
    y = (h - mean) / jnp.sqrt(var + EPS) * gamma + beta
    return jnp.maximum(y, 0.0)


if __name__ == "__main__":
    key = jax.random.PRNGKey(0)
    N, D_IN, D_OUT = 8, 32, 64

    kx, kw, kb = jax.random.split(key, 3)
    x = jax.random.normal(kx, (N, D_IN), dtype=jnp.float32)

    # nn.Linear default init: uniform(-1/sqrt(fan_in), +1/sqrt(fan_in))
    bound = 1.0 / jnp.sqrt(jnp.float32(D_IN))
    w = jax.random.uniform(kw, (D_IN, D_OUT), minval=-bound, maxval=bound,
                           dtype=jnp.float32)
    b = jax.random.uniform(kb, (D_OUT,), minval=-bound, maxval=bound,
                           dtype=jnp.float32)
    # BatchNorm1d affine defaults: gamma=1, beta=0
    gamma = jnp.ones((D_OUT,), dtype=jnp.float32)
    beta = jnp.zeros((D_OUT,), dtype=jnp.float32)

    ref = reference(x, w, b, gamma, beta)

    # f32 path: PyTorch-exact numerics (default).
    out = basic_block(x, w, b, gamma, beta, compute_dtype=jnp.float32)
    jax.block_until_ready(out)
    assert out.shape == (N, D_OUT)
    assert jnp.allclose(out, ref, atol=1e-4, rtol=1e-4), "f32 mismatch vs reference"

    # bf16 MXU-input fast path (weight-streaming-bound small-N regime):
    # f32 accumulation + f32 BN math, looser tolerance by construction.
    out_bf16 = basic_block(x, w, b, gamma, beta, compute_dtype=jnp.bfloat16)
    jax.block_until_ready(out_bf16)
    assert out_bf16.shape == (N, D_OUT)
    assert bool(jnp.all(jnp.isfinite(out_bf16)))
    assert jnp.allclose(out_bf16, ref, atol=1e-1, rtol=1e-1), "bf16 mismatch vs reference"

    print("KERNEL_OK")
</pallas_src>

<mosaic_0001>
module attributes {stable_mosaic.version = 11 : i64} {
  func.func @basic_block_kernel_single(%arg0: i32, %arg1: i32, %arg2: memref<8x128xf32, #tpu.memory_space<vmem>>, %arg3: memref<128x128xf32, #tpu.memory_space<vmem>>, %arg4: memref<2x128xf32, #tpu.memory_space<vmem>>, %arg5: memref<8x128xf32, #tpu.memory_space<vmem>>) attributes {dimension_semantics = [#tpu.dimension_semantics<parallel>, #tpu.dimension_semantics<arbitrary>], iteration_bounds = array<i64: 1, 1>, scalar_prefetch = 0 : i64, scratch_operands = 0 : i64, tpu.core_type = #tpu.core_type<tc>, window_params = [{transform_indices = @transform_0, window_bounds = array<i64: 8, 128>}, {transform_indices = @transform_1, window_bounds = array<i64: 128, 128>}, {transform_indices = @transform_2, window_bounds = array<i64: 2, 128>}, {transform_indices = @transform_3, window_bounds = array<i64: 8, 128>}]} {
    %c0 = arith.constant 0 : index
    %c0_0 = arith.constant 0 : index
    %0 = vector.load %arg2[%c0, %c0_0] : memref<8x128xf32, #tpu.memory_space<vmem>>, vector<8x128xf32>
    %c0_1 = arith.constant 0 : index
    %c0_2 = arith.constant 0 : index
    %1 = vector.load %arg3[%c0_1, %c0_2] : memref<128x128xf32, #tpu.memory_space<vmem>>, vector<128x128xf32>
    %cst = arith.constant dense<0.000000e+00> : vector<8x128xf32>
    %2 = tpu.matmul %0, %1, %cst {dimension_numbers = #tpu.dot_dimension_numbers<[1], [0], [0], [1], [0, 0, 1, 1], [], []>} : vector<8x128xf32>, vector<128x128xf32>, vector<8x128xf32> -> vector<8x128xf32>
    %cst_3 = arith.constant dense<0.000000e+00> : vector<128xf32>
    %3 = vector.multi_reduction <add>, %2, %cst_3 [0] : vector<8x128xf32> to vector<128xf32>
    %4 = vector.shape_cast %3 : vector<128xf32> to vector<1x128xf32>
    %cst_4 = arith.constant 8.000000e+00 : f32
    %5 = vector.broadcast %cst_4 : f32 to vector<1x128xf32>
    %6 = arith.divf %4, %5 : vector<1x128xf32>
    %7 = vector.broadcast %6 : vector<1x128xf32> to vector<8x128xf32>
    %8 = arith.subf %2, %7 : vector<8x128xf32>
    %9 = arith.mulf %8, %8 : vector<8x128xf32>
    %cst_5 = arith.constant dense<0.000000e+00> : vector<128xf32>
    %10 = vector.multi_reduction <add>, %9, %cst_5 [0] : vector<8x128xf32> to vector<128xf32>
    %11 = vector.shape_cast %10 : vector<128xf32> to vector<1x128xf32>
    %cst_6 = arith.constant 8.000000e+00 : f32
    %12 = vector.broadcast %cst_6 : f32 to vector<1x128xf32>
    %13 = arith.divf %11, %12 : vector<1x128xf32>
    %cst_7 = arith.constant 9.99999974E-6 : f32
    %14 = vector.broadcast %cst_7 : f32 to vector<1x128xf32>
    %15 = arith.addf %13, %14 : vector<1x128xf32>
    %16 = math.rsqrt %15 : vector<1x128xf32>
    %c0_8 = arith.constant 0 : index
    %c0_9 = arith.constant 0 : index
    %17 = vector.load %arg4[%c0_8, %c0_9] : memref<2x128xf32, #tpu.memory_space<vmem>>, vector<1x128xf32>
    %18 = arith.mulf %16, %17 : vector<1x128xf32>
    %c1 = arith.constant 1 : index
    %c0_10 = arith.constant 0 : index
    %19 = vector.load %arg4[%c1, %c0_10] : memref<2x128xf32, #tpu.memory_space<vmem>>, vector<1x128xf32>
    %20 = vector.broadcast %18 : vector<1x128xf32> to vector<8x128xf32>
    %21 = arith.mulf %8, %20 : vector<8x128xf32>
    %22 = vector.broadcast %19 : vector<1x128xf32> to vector<8x128xf32>
    %23 = arith.addf %21, %22 : vector<8x128xf32>
    %cst_11 = arith.constant 0.000000e+00 : f32
    %24 = vector.broadcast %cst_11 : f32 to vector<8x128xf32>
    %25 = arith.maximumf %23, %24 : vector<8x128xf32>
    %c0_12 = arith.constant 0 : index
    %c0_13 = arith.constant 0 : index
    %26 = vector.load %arg5[%c0_12, %c0_13] : memref<8x128xf32, #tpu.memory_space<vmem>>, vector<8x128xf32>
    tpu.vector_store %arg5[%c0_12, %c0_13], %25 {strides = array<i32>} : memref<8x128xf32, #tpu.memory_space<vmem>>, vector<8x128xf32>,
    return
  }
  func.func @transform_0(%arg0: i32, %arg1: i32) -> (i32, i32) {
    %c0_i32 = arith.constant 0 : i32
    %c0_i32_0 = arith.constant 0 : i32
    return %c0_i32, %arg1 : i32, i32
  }
  func.func @transform_1(%arg0: i32, %arg1: i32) -> (i32, i32) {
    %c0_i32 = arith.constant 0 : i32
    return %arg1, %arg0 : i32, i32
  }
  func.func @transform_2(%arg0: i32, %arg1: i32) -> (i32, i32) {
    %c0_i32 = arith.constant 0 : i32
    %c0_i32_0 = arith.constant 0 : i32
    return %c0_i32, %arg0 : i32, i32
  }
  func.func @transform_3(%arg0: i32, %arg1: i32) -> (i32, i32) {
    %c0_i32 = arith.constant 0 : i32
    %c0_i32_0 = arith.constant 0 : i32
    return %c0_i32, %arg0 : i32, i32
  }
}

</mosaic_0001>

<llo_original>
// kernel: basic_block.1
$region0: #{basic_block.1}
  #allocation0 [shape = 'u32[]', space=smem, size = 0x4, offset = 0x4, fixed_abs, tag = 'smem constant byte address 0x4 - core index']
  #allocation1 [shape = 'u32[144,128]{1,0:T(1,128)}', space=vmem, size = 0x12000, scoped, tag = 'internal scratch']
  %s0 = inlined_call_operand.vmem [shape: f32[8,128], index: 0, kind: input, shape index: {}]
  %s1 = inlined_call_operand.vmem [shape: f32[128,128], index: 1, kind: input, shape index: {}]
  %s2 = inlined_call_operand.vmem [shape: f32[2,128], index: 2, kind: input, shape index: {}]
  %s3 = inlined_call_operand.hbm [shape: f32[8,128], index: 3, kind: output, shape index: {}]
  %s4 = sld [smem:[#allocation0]]
  $region22: #{basic_block.1} parent=0
    _
  %s6 = ssub.s32 1, %s4
  %s7 = scalar_select 0, %s6, %s4
  $region1: #{basic_block.1} parent=0
    #allocation2 [shape = 'u8[4096]{0}', space=vmem, size = 0x1000, scoped, tag = 'output window, operand 0, single buffered']
    #allocation3 [shape = 's32[1]{0}', space=sflag, size = 0x4, scoped, tag = 'scoped memory for basic_block.1']
    %8 = vsyncpa [#allocation3], 0
    // Predicated region
    $region2: #{basic_block.1} parent=1 // pred_check
      _
    $region3: #{basic_block.1} parent=1 // pred_check_branch
      %10 = sbr.rel (0) target = $region5
    $region4: #{basic_block.1} parent=1 // pred_region
      _
    $region5: #{basic_block.1} parent=1 // pred_fallthru
      _
    // Predicated region
    $region6: #{basic_block.1} parent=1 // pred_check
      _
    $region7: #{basic_block.1} parent=1 // pred_check_branch
      %12 = sbr.rel (0) target = $region9
    $region8: #{basic_block.1} parent=1 // pred_region
      _
    $region9: #{basic_block.1} parent=1 // pred_fallthru
      _
    // Predicated region
    $region10: #{basic_block.1} parent=1 // pred_check
      _
    $region11: #{basic_block.1} parent=1 // pred_check_branch
      %14 = sbr.rel (0) target = $region13
    $region12: #{basic_block.1} parent=1 // pred_region
      _
    $region13: #{basic_block.1} parent=1 // pred_fallthru
      _
    %v15 = vld [vmem:[%s0] sm:$0xff]
    %v16 = vld [vmem:[%s1] sm:$0xff]
    %v17 = vld [vmem:[%s1 + $0x8] sm:$0xff]
    %v18 = vld [vmem:[%s1 + $0x10] sm:$0xff]
    %v19 = vld [vmem:[%s1 + $0x18] sm:$0xff]
    %v20 = vld [vmem:[%s1 + $0x20] sm:$0xff]
    %v21 = vld [vmem:[%s1 + $0x28] sm:$0xff]
    %v22 = vld [vmem:[%s1 + $0x30] sm:$0xff]
    %v23 = vld [vmem:[%s1 + $0x38] sm:$0xff]
    %v24 = vld [vmem:[%s1 + $0x40] sm:$0xff]
    %v25 = vld [vmem:[%s1 + $0x48] sm:$0xff]
    %v26 = vld [vmem:[%s1 + $0x50] sm:$0xff]
    %v27 = vld [vmem:[%s1 + $0x58] sm:$0xff]
    %v28 = vld [vmem:[%s1 + $0x60] sm:$0xff]
    %v29 = vld [vmem:[%s1 + $0x68] sm:$0xff]
    %v30 = vld [vmem:[%s1 + $0x70] sm:$0xff]
    %v31 = vld [vmem:[%s1 + $0x78] sm:$0xff]
    %32 = vmatprep.subr.mxu0 0.0
    %33 = vmatpush1.msra.mxu0 %v31
    %34 = vmatprep.subr.mxu0 0.0
    %35 = vmatpush1.msra.mxu0 %v30
    %36 = vmatprep.subr.mxu0 0.0
    %37 = vmatpush1.msra.mxu0 %v29
    %38 = vmatprep.subr.mxu0 0.0
    %39 = vmatpush1.msra.mxu0 %v28
    %40 = vmatprep.subr.mxu0 0.0
    %41 = vmatpush1.msra.mxu0 %v27
    %42 = vmatprep.subr.mxu0 0.0
    %43 = vmatpush1.msra.mxu0 %v26
    %44 = vmatprep.subr.mxu0 0.0
    %45 = vmatpush1.msra.mxu0 %v25
    %46 = vmatprep.subr.mxu0 0.0
    %47 = vmatpush1.msra.mxu0 %v24
    %48 = vmatprep.subr.mxu0 0.0
    %49 = vmatpush1.msra.mxu0 %v23
    %50 = vmatprep.subr.mxu0 0.0
    %51 = vmatpush1.msra.mxu0 %v22
    %52 = vmatprep.subr.mxu0 0.0
    %53 = vmatpush1.msra.mxu0 %v21
    %54 = vmatprep.subr.mxu0 0.0
    %55 = vmatpush1.msra.mxu0 %v20
    %56 = vmatprep.subr.mxu0 0.0
    %57 = vmatpush1.msra.mxu0 %v19
    %58 = vmatprep.subr.mxu0 0.0
    %59 = vmatpush1.msra.mxu0 %v18
    %60 = vmatprep.subr.mxu0 0.0
    %61 = vmatpush1.msra.mxu0 %v17
    %62 = vmatprep.subr.mxu0 0.0
    %63 = vmatpush1.msra.mxu0 %v16
    %64 = vmatprep.subr.mxu0 0.0
    %65 = vmatpush2.msra.mxu0 0.0
    %66 = vmatprep.subr.mxu0 0.0
    %67 = vmatpush2.msra.mxu0 0.0
    %68 = vmatprep.subr.mxu0 0.0
    %69 = vmatpush2.msra.mxu0 0.0
    %70 = vmatprep.subr.mxu0 0.0
    %71 = vmatpush2.msra.mxu0 0.0
    %72 = vmatprep.subr.mxu0 0.0
    %73 = vmatpush2.msra.mxu0 0.0
    %74 = vmatprep.subr.mxu0 0.0
    %75 = vmatpush2.msra.mxu0 0.0
    %76 = vmatprep.subr.mxu0 0.0
    %77 = vmatpush2.msra.mxu0 0.0
    %78 = vmatprep.subr.mxu0 0.0
    %79 = vmatpush2.msra.mxu0 0.0
    %80 = vmatprep.subr.mxu0 0.0
    %81 = vmatpush2.msra.mxu0 0.0
    %82 = vmatprep.subr.mxu0 0.0
    %83 = vmatpush2.msra.mxu0 0.0
    %84 = vmatprep.subr.mxu0 0.0
    %85 = vmatpush2.msra.mxu0 0.0
    %86 = vmatprep.subr.mxu0 0.0
    %87 = vmatpush2.msra.mxu0 0.0
    %88 = vmatprep.subr.mxu0 0.0
    %89 = vmatpush2.msra.mxu0 0.0
    %90 = vmatprep.subr.mxu0 0.0
    %91 = vmatpush2.msra.mxu0 0.0
    %92 = vmatprep.subr.mxu0 0.0
    %93 = vmatpush2.msra.mxu0 0.0
    %94 = vmatprep.subr.mxu0 0.0
    %95 = vmatpush2.msra.mxu0 0.0
    %96 = vmatprep.mubr.f32.mxu0 0.0
    %97 = vmatmul.mubr.f32.gmra.mxu0 %v15
    %v98 = vpop.f32.mrf.mxu0
    %v99 = vadd.f32 0.0, %v98
    %v100 = vpop.f32.mrf.mxu0
    %101 = vdwg.mxu0
    %v102 = vrot.slane %v99, 4
    %v103 = vadd.f32 %v99, %v102
    %v104 = vrot.slane %v103, 2
    %v105 = vadd.f32 %v103, %v104
    %v106 = vrot.slane %v105, 1
    %v107 = vadd.f32 %v105, %v106
    %v108 = vrcp.pop 8.0
    %v109 = vmul.f32 %v107, %v108
    %v110 = vsub.f32 %v99, %v109
    %v111 = vmul.f32 %v110, %v110
    %v112 = vrot.slane %v111, 4
    %v113 = vadd.f32 %v111, %v112
    %v114 = vrot.slane %v113, 2
    %v115 = vadd.f32 %v113, %v114
    %v116 = vrot.slane %v115, 1
    %v117 = vadd.f32 %v115, %v116
    %v118 = vmul.f32 %v117, %v108
    %v119 = vadd.f32 %v118, 1e-05
    %v120 = vrsqrt.pop %v119
    %v121 = vld [vmem:[%s2] sm:$0x1]
    %v122 = vmul.f32 %v120, %v121
    %v123 = vld [vmem:[%s2 + $0x1] sm:$0x1]
    %v124 = vlaneseq
    %v125 = vshrl.u32 %v124, 7
    %v126 = vsub.s32 0, %v125
    %v127 = vrot.slane %v122, %v126
    %v128 = vmul.f32 %v110, %v127
    %v129 = vlaneseq
    %v130 = vshrl.u32 %v129, 7
    %v131 = vsub.s32 0, %v130
    %v132 = vrot.slane %v123, %v131
    %v133 = vadd.f32 %v128, %v132
    %v134 = vmax.f32 %v133, 0.0
    %135 = vst [vmem:[#allocation2] sm:$0xff] %v134
    // Predicated region
    $region14: #{basic_block.1} parent=1 // pred_check
      _
    $region15: #{basic_block.1} parent=1 // pred_check_branch
      %137 = sbr.rel (0) target = $region17
    $region16: #{basic_block.1} parent=1 // pred_region
      %s139 = ssub.s32 128, 128
      %140 = vsyncadd [#allocation3], %s139
      %s142 = sshll.u32 [#allocation2], 4
      %s143 = int_to_ptr.vmem [resolvable:$true] %s142
      %145 = dma.vmem_to_hbm [thread:$0]  %s143, 128, %s3, [#allocation3]
    $region17: #{basic_block.1} parent=1 // pred_fallthru
      _
    // Predicated region
    $region18: #{basic_block.1} parent=1 // pred_check
      _
    $region19: #{basic_block.1} parent=1 // pred_check_branch
      %147 = sbr.rel (0) target = $region21
    $region20: #{basic_block.1} parent=1 // pred_region
      %148 = dma.done [#allocation3], 128
    $region21: #{basic_block.1} parent=1 // pred_fallthru
      _
    %149 = vsyncpa [#allocation3], 1

</llo_original>
